<compile_context>
chip_gen: v7x
topology: tpu7x:2x2x1
jax: 0.10.0
libtpu: 0.0.40
codegen_flags: <defaults>
</compile_context>

<pallas_src>
import jax
import jax.numpy as jnp
from jax.experimental import pallas as pl
from jax.experimental.pallas import tpu as pltpu


def _round_up(x, m):
    return ((x + m - 1) // m) * m


def _cdiv(a, b):
    return (a + b - 1) // b


# ----------------------------------------------------------------------------
# Pallas kernel: stacked-shift operand build + ONE fused matmul + fp32 epilogue
# ----------------------------------------------------------------------------
def _make_volterra_kernel(k, cin_p, rank, cout_p, ta, halo, wp):
    kk = k * k

    def kernel(xm_ref, xh_ref, w_ref, b_ref, o_ref, xwin_ref, xs_ref):
        # xm_ref:   (1, Cin_p, TA)      anchors [t*TA, (t+1)*TA)           (pipelined)
        # xh_ref:   (1, Cin_p, HALO)    anchors [(t+1)*TA, (t+1)*TA+HALO)  (pipelined)
        # w_ref:    (C_rows, K)         fused weights, K = k*k*Cin_p       (resident)
        # b_ref:    (C_rows, 1)         fused bias, fp32                   (resident)
        # o_ref:    (1, Cout_p, TA)     lane-dense output tile
        # xwin_ref: (Cin_p, TA+HALO)    VMEM scratch: contiguous anchor window
        # xs_ref:   (K, TA)             VMEM scratch: stacked shifted slabs

        # Contiguous window for this tile (both stores lane-aligned).
        xwin_ref[:, 0:ta] = xm_ref[0]
        xwin_ref[:, ta:ta + halo] = xh_ref[0]

        # Stack the k*k shifted slabs along the contraction axis.  The
        # unaligned lane realignment is paid exactly once per tap; the store
        # offset tap*Cin_p is native-sublane-tile aligned.
        for tap in range(kk):                               # static unroll (k*k)
            off = (tap // k) * wp + (tap % k)
            xs_ref[tap * cin_p:(tap + 1) * cin_p, :] = xwin_ref[:, off:off + ta]

        # One fused MXU matmul: (C_rows, K) @ (K, TA) -> fp32 (C_rows, TA),
        # then bias (lane broadcast) in fp32.
        y = jnp.dot(w_ref[...], xs_ref[...],
                    preferred_element_type=jnp.float32) + b_ref[...]

        # fp32 epilogue: clamp, rank products, rank sum (8-row-aligned slices).
        lin = y[:cout_p, :]
        qa = jnp.clip(y[cout_p:cout_p * (1 + rank), :], -1.0, 1.0)
        qb = jnp.clip(y[cout_p * (1 + rank):, :], -1.0, 1.0)
        prod = qa * qb
        out = lin
        for r in range(rank):                               # rank sum = VPU adds
            out = out + prod[r * cout_p:(r + 1) * cout_p, :]

        o_ref[0] = out.astype(o_ref.dtype)

    return kernel


# ----------------------------------------------------------------------------
# Wrapper: pad/flatten input, fuse & pad weights, pallas_call, crop.
# ----------------------------------------------------------------------------
def volterra_layer_2d(x_nchw, params, *, kernel_size=3, rank=4,
                      compute_dtype=jnp.bfloat16, out_dtype=None):
    # NOTE: with the default compute_dtype=bfloat16, activations and weights
    # are quantized to bf16 before the MXU matmul (operand quantization, not
    # just matmul rounding); accumulation and the whole epilogue remain fp32.
    w1, b1 = params["w1"], params["b1"]            # (Cout,Cin,k,k), (Cout,)
    wa, ba = params["wa"], params["ba"]            # (R,Cout,Cin,k,k), (R,Cout)
    wb, bb = params["wb"], params["bb"]

    N, Cin, H, W = x_nchw.shape
    Cout = w1.shape[0]
    k = kernel_size
    p = k // 2
    Hp, Wp = H + 2 * p, W + 2 * p
    kk = k * k
    if out_dtype is None:
        out_dtype = x_nchw.dtype

    itemsize = jnp.dtype(compute_dtype).itemsize
    sub = 32 // itemsize                       # native sublane rows: 8 f32 / 16 bf16
    Cin_p = _round_up(Cin, sub)                # aligned per-tap slab offsets
    Cout_p = _round_up(Cout, 8)                # epilogue slices are fp32
    C_rows = (1 + 2 * rank) * Cout_p
    K = kk * Cin_p

    # ---- anchor geometry (anchor = flattened padded-spatial index, on lanes)
    A = H * Wp                                 # anchors holding real outputs
    max_off = (k - 1) * Wp + (k - 1)           # largest tap shift
    HALO = max(128, _round_up(max_off, 128))

    # Tile sized so the fp32 accumulator + epilogue stays (near) vreg-resident;
    # must be a multiple of HALO so (t+1)*TA is a legal HALO-block index.
    ta = max(256, _round_up((512 * 72) // C_rows, 128))
    ta = min(ta, 2048)
    TA = _round_up(max(ta, HALO), HALO)
    num_tiles = _cdiv(A, TA)
    if N * num_tiles < 2 and A > HALO:         # give v7x's 2nd TensorCore work
        TA = _round_up(_cdiv(A, 2), HALO)
        num_tiles = _cdiv(A, TA)
    A_total = num_tiles * TA
    L = A_total + HALO                         # flattened, zero-padded length

    # ---- glue: pad channels + spatial, flatten spatial onto the lane axis --
    xp = jnp.pad(x_nchw.astype(compute_dtype),
                 ((0, 0), (0, Cin_p - Cin), (p, p), (p, p)))
    xf = jnp.pad(xp.reshape(N, Cin_p, Hp * Wp),
                 ((0, 0), (0, 0), (0, L - Hp * Wp)))           # (N, Cin_p, L)

    # ---- glue: fuse all conv weights/biases (linear | rank-a | rank-b) -----
    def pack_w(w_oihw):   # (Cout,Cin,k,k) -> (Cout_p, kk*Cin_p), tap-major/cin-minor
        w = jnp.transpose(w_oihw, (0, 2, 3, 1))                # (Cout,k,k,Cin)
        w = jnp.pad(w, ((0, Cout_p - Cout), (0, 0), (0, 0), (0, Cin_p - Cin)))
        return w.reshape(Cout_p, K)

    def pack_b(b):        # (Cout,) -> (Cout_p,), zero in padded rows
        return jnp.pad(b, (0, Cout_p - Cout))

    w_all = jnp.concatenate(
        [pack_w(w1)] + [pack_w(wa[r]) for r in range(rank)]
        + [pack_w(wb[r]) for r in range(rank)], axis=0).astype(compute_dtype)
    b_all = jnp.concatenate(
        [pack_b(b1)] + [pack_b(ba[r]) for r in range(rank)]
        + [pack_b(bb[r]) for r in range(rank)]).reshape(C_rows, 1).astype(jnp.float32)

    # ---- VMEM budget: actual double-buffered blocks + scratch + headroom ---
    out_isize = jnp.dtype(out_dtype).itemsize
    vmem_needed = (2 * Cin_p * TA * itemsize          # main input block
                   + 2 * Cin_p * HALO * itemsize      # halo input block
                   + 2 * C_rows * K * itemsize        # fused weights
                   + 2 * C_rows * 128 * 4             # bias (lane-padded)
                   + 2 * Cout_p * TA * out_isize      # output block
                   + Cin_p * (TA + HALO) * itemsize   # xwin scratch
                   + K * TA * itemsize                # xs scratch
                   + 4 * C_rows * TA * 4)             # fp32 epilogue temporaries
    try:
        vmem_cap = int(pltpu.get_tpu_info().vmem_capacity_bytes)
    except Exception:
        vmem_cap = 64 * 1024 * 1024                   # conservative (v7x per-core)
    vmem_limit = min(int(0.8 * vmem_cap),
                     max(16 * 1024 * 1024, vmem_needed + (8 << 20)))

    kernel = _make_volterra_kernel(k, Cin_p, rank, Cout_p, TA, HALO, Wp)

    out_flat = pl.pallas_call(
        kernel,
        out_shape=jax.ShapeDtypeStruct((N, Cout_p, A_total), out_dtype),
        grid_spec=pltpu.PrefetchScalarGridSpec(
            num_scalar_prefetch=0,
            grid=(N, num_tiles),
            in_specs=[
                # main anchor window [t*TA, (t+1)*TA)
                pl.BlockSpec((1, Cin_p, TA), lambda n, t: (n, 0, t)),
                # halo window [(t+1)*TA, (t+1)*TA + HALO); HALO | TA by construction
                pl.BlockSpec((1, Cin_p, HALO),
                             lambda n, t: (n, 0, (t + 1) * (TA // HALO))),
                pl.BlockSpec((C_rows, K), lambda n, t: (0, 0)),     # resident weights
                pl.BlockSpec((C_rows, 1), lambda n, t: (0, 0)),     # resident bias
            ],
            out_specs=pl.BlockSpec((1, Cout_p, TA), lambda n, t: (n, 0, t)),
            scratch_shapes=[
                pltpu.VMEM((Cin_p, TA + HALO), compute_dtype),      # xwin
                pltpu.VMEM((K, TA), compute_dtype),                 # stacked slabs
            ],
        ),
        compiler_params=pltpu.CompilerParams(
            dimension_semantics=("parallel", "parallel"),
            vmem_limit_bytes=vmem_limit),
    )(xf, xf, w_all, b_all)

    # Crop: drop padded channel rows & garbage anchors (col >= W) -> NCHW.
    # (Consumers that accept the padded (N, Cout_p, H, Wp) layout can skip
    #  this extra XLA read/write pass by taking out_flat directly.)
    out = out_flat[:, :Cout, :A].reshape(N, Cout, H, Wp)[:, :, :, :W]
    return out
    # TODO(synk): the torch module's host-side isnan/isinf debug prints are
    # intentionally omitted (side-effect-only, no effect on the output).


# ----------------------------------------------------------------------------
# Deterministic parameter init (matches Conv2d shapes; kaiming-normal style)
# ----------------------------------------------------------------------------
def init_params(key, in_channels, out_channels, kernel_size, rank):
    fan_in = in_channels * kernel_size * kernel_size
    w_std = (1.0 / fan_in) ** 0.5           # kaiming_normal, linear gain
    b_bound = (1.0 / fan_in) ** 0.5         # PyTorch Conv2d default bias init

    keys = jax.random.split(key, 6)
    w_shape = (out_channels, in_channels, kernel_size, kernel_size)
    params = {
        "w1": w_std * jax.random.normal(keys[0], w_shape, jnp.float32),
        "b1": jax.random.uniform(keys[1], (out_channels,), jnp.float32,
                                 -b_bound, b_bound),
        "wa": w_std * jax.random.normal(keys[2], (rank,) + w_shape, jnp.float32),
        "ba": jax.random.uniform(keys[3], (rank, out_channels), jnp.float32,
                                 -b_bound, b_bound),
        "wb": w_std * jax.random.normal(keys[4], (rank,) + w_shape, jnp.float32),
        "bb": jax.random.uniform(keys[5], (rank, out_channels), jnp.float32,
                                 -b_bound, b_bound),
    }
    return params


# ----------------------------------------------------------------------------
# Pure-JAX reference (lax conv) for correctness check
# ----------------------------------------------------------------------------
def reference_forward(x, params, *, rank=4):
    def conv(x, w, b):
        y = jax.lax.conv_general_dilated(
            x, w, window_strides=(1, 1), padding="SAME",
            dimension_numbers=("NCHW", "OIHW", "NCHW"))
        return y + b[None, :, None, None]

    lin = conv(x, params["w1"], params["b1"])
    quad = jnp.zeros_like(lin)
    for r in range(rank):
        qa = jnp.clip(conv(x, params["wa"][r], params["ba"][r]), -1.0, 1.0)
        qb = jnp.clip(conv(x, params["wb"][r], params["bb"][r]), -1.0, 1.0)
        quad = quad + qa * qb
    return lin + quad


if __name__ == "__main__":
    N, Cin, Cout, H, W = 2, 4, 4, 16, 16
    K, RANK = 3, 4

    key = jax.random.PRNGKey(0)
    kx, kp = jax.random.split(key)
    x = jax.random.normal(kx, (N, Cin, H, W), jnp.float32)
    params = init_params(kp, Cin, Cout, K, RANK)

    ref = jax.block_until_ready(reference_forward(x, params, rank=RANK))

    # fp32 matmul operands (debug mode; tight correctness check)
    out32 = jax.block_until_ready(
        volterra_layer_2d(x, params, kernel_size=K, rank=RANK,
                          compute_dtype=jnp.float32))
    assert out32.shape == (N, Cout, H, W), out32.shape
    err32 = float(jnp.max(jnp.abs(out32 - ref)))
    assert err32 < 1e-3, f"fp32 max abs error {err32}"

    # default: bf16 matmul operands (all generations), fp32 accum + fp32 epilogue
    out16 = jax.block_until_ready(
        volterra_layer_2d(x, params, kernel_size=K, rank=RANK))
    assert out16.shape == (N, Cout, H, W), out16.shape
    err16 = float(jnp.max(jnp.abs(out16 - ref)))
    assert err16 < 2.5e-1, f"bf16 max abs error {err16}"

    print("KERNEL_OK")
</pallas_src>

<mosaic_0001>
module attributes {stable_mosaic.version = 11 : i64} {
  func.func @kernel(%arg0: i32, %arg1: i32, %arg2: memref<1x8x512xf32, #tpu.memory_space<vmem>>, %arg3: memref<1x8x128xf32, #tpu.memory_space<vmem>>, %arg4: memref<72x72xf32, #tpu.memory_space<vmem>>, %arg5: memref<72x1xf32, #tpu.memory_space<vmem>>, %arg6: memref<1x8x512xf32, #tpu.memory_space<vmem>>, %arg7: memref<8x640xf32, #tpu.memory_space<vmem>>, %arg8: memref<72x512xf32, #tpu.memory_space<vmem>>) attributes {dimension_semantics = [#tpu.dimension_semantics<parallel>, #tpu.dimension_semantics<parallel>], iteration_bounds = array<i64: 2, 1>, scalar_prefetch = 0 : i64, scratch_operands = 2 : i64, tpu.core_type = #tpu.core_type<tc>, window_params = [{transform_indices = @transform_0, window_bounds = array<i64: 1, 8, 512>}, {transform_indices = @transform_1, window_bounds = array<i64: 1, 8, 128>}, {pipeline_mode = #tpu.pipeline_mode<synchronous>, transform_indices = @transform_2, window_bounds = array<i64: 72, 72>}, {pipeline_mode = #tpu.pipeline_mode<synchronous>, transform_indices = @transform_3, window_bounds = array<i64: 72, 1>}, {transform_indices = @transform_4, window_bounds = array<i64: 1, 8, 512>}]} {
    %c0 = arith.constant 0 : index
    %c0_0 = arith.constant 0 : index
    %c0_1 = arith.constant 0 : index
    %0 = vector.load %arg2[%c0, %c0_0, %c0_1] : memref<1x8x512xf32, #tpu.memory_space<vmem>>, vector<1x8x512xf32>
    %1 = vector.shape_cast %0 : vector<1x8x512xf32> to vector<8x512xf32>
    %c0_2 = arith.constant 0 : index
    %c0_3 = arith.constant 0 : index
    %2 = vector.load %arg7[%c0_2, %c0_3] : memref<8x640xf32, #tpu.memory_space<vmem>>, vector<8x512xf32>
    tpu.vector_store %arg7[%c0_2, %c0_3], %1 {strides = array<i32>} : memref<8x640xf32, #tpu.memory_space<vmem>>, vector<8x512xf32>,
    %c0_4 = arith.constant 0 : index
    %c0_5 = arith.constant 0 : index
    %c0_6 = arith.constant 0 : index
    %3 = vector.load %arg3[%c0_4, %c0_5, %c0_6] : memref<1x8x128xf32, #tpu.memory_space<vmem>>, vector<1x8x128xf32>
    %4 = vector.shape_cast %3 : vector<1x8x128xf32> to vector<8x128xf32>
    %c0_7 = arith.constant 0 : index
    %c512 = arith.constant 512 : index
    %5 = vector.load %arg7[%c0_7, %c512] : memref<8x640xf32, #tpu.memory_space<vmem>>, vector<8x128xf32>
    tpu.vector_store %arg7[%c0_7, %c512], %4 {strides = array<i32>} : memref<8x640xf32, #tpu.memory_space<vmem>>, vector<8x128xf32>,
    %c0_8 = arith.constant 0 : index
    %c0_9 = arith.constant 0 : index
    %6 = vector.load %arg7[%c0_8, %c0_9] : memref<8x640xf32, #tpu.memory_space<vmem>>, vector<8x512xf32>
    %c0_10 = arith.constant 0 : index
    %c0_11 = arith.constant 0 : index
    %7 = vector.load %arg8[%c0_10, %c0_11] : memref<72x512xf32, #tpu.memory_space<vmem>>, vector<8x512xf32>
    tpu.vector_store %arg8[%c0_10, %c0_11], %6 {strides = array<i32>} : memref<72x512xf32, #tpu.memory_space<vmem>>, vector<8x512xf32>,
    %c0_12 = arith.constant 0 : index
    %c1 = arith.constant 1 : index
    %8 = vector.load %arg7[%c0_12, %c1] : memref<8x640xf32, #tpu.memory_space<vmem>>, vector<8x512xf32>
    %c8 = arith.constant 8 : index
    %c0_13 = arith.constant 0 : index
    %9 = vector.load %arg8[%c8, %c0_13] : memref<72x512xf32, #tpu.memory_space<vmem>>, vector<8x512xf32>
    tpu.vector_store %arg8[%c8, %c0_13], %8 {strides = array<i32>} : memref<72x512xf32, #tpu.memory_space<vmem>>, vector<8x512xf32>,
    %c0_14 = arith.constant 0 : index
    %c2 = arith.constant 2 : index
    %10 = vector.load %arg7[%c0_14, %c2] : memref<8x640xf32, #tpu.memory_space<vmem>>, vector<8x512xf32>
    %c16 = arith.constant 16 : index
    %c0_15 = arith.constant 0 : index
    %11 = vector.load %arg8[%c16, %c0_15] : memref<72x512xf32, #tpu.memory_space<vmem>>, vector<8x512xf32>
    tpu.vector_store %arg8[%c16, %c0_15], %10 {strides = array<i32>} : memref<72x512xf32, #tpu.memory_space<vmem>>, vector<8x512xf32>,
    %c0_16 = arith.constant 0 : index
    %c18 = arith.constant 18 : index
    %12 = vector.load %arg7[%c0_16, %c18] : memref<8x640xf32, #tpu.memory_space<vmem>>, vector<8x512xf32>
    %c24 = arith.constant 24 : index
    %c0_17 = arith.constant 0 : index
    %13 = vector.load %arg8[%c24, %c0_17] : memref<72x512xf32, #tpu.memory_space<vmem>>, vector<8x512xf32>
    tpu.vector_store %arg8[%c24, %c0_17], %12 {strides = array<i32>} : memref<72x512xf32, #tpu.memory_space<vmem>>, vector<8x512xf32>,
    %c0_18 = arith.constant 0 : index
    %c19 = arith.constant 19 : index
    %14 = vector.load %arg7[%c0_18, %c19] : memref<8x640xf32, #tpu.memory_space<vmem>>, vector<8x512xf32>
    %c32 = arith.constant 32 : index
    %c0_19 = arith.constant 0 : index
    %15 = vector.load %arg8[%c32, %c0_19] : memref<72x512xf32, #tpu.memory_space<vmem>>, vector<8x512xf32>
    tpu.vector_store %arg8[%c32, %c0_19], %14 {strides = array<i32>} : memref<72x512xf32, #tpu.memory_space<vmem>>, vector<8x512xf32>,
    %c0_20 = arith.constant 0 : index
    %c20 = arith.constant 20 : index
    %16 = vector.load %arg7[%c0_20, %c20] : memref<8x640xf32, #tpu.memory_space<vmem>>, vector<8x512xf32>
    %c40 = arith.constant 40 : index
    %c0_21 = arith.constant 0 : index
    %17 = vector.load %arg8[%c40, %c0_21] : memref<72x512xf32, #tpu.memory_space<vmem>>, vector<8x512xf32>
    tpu.vector_store %arg8[%c40, %c0_21], %16 {strides = array<i32>} : memref<72x512xf32, #tpu.memory_space<vmem>>, vector<8x512xf32>,
    %c0_22 = arith.constant 0 : index
    %c36 = arith.constant 36 : index
    %18 = vector.load %arg7[%c0_22, %c36] : memref<8x640xf32, #tpu.memory_space<vmem>>, vector<8x512xf32>
    %c48 = arith.constant 48 : index
    %c0_23 = arith.constant 0 : index
    %19 = vector.load %arg8[%c48, %c0_23] : memref<72x512xf32, #tpu.memory_space<vmem>>, vector<8x512xf32>
    tpu.vector_store %arg8[%c48, %c0_23], %18 {strides = array<i32>} : memref<72x512xf32, #tpu.memory_space<vmem>>, vector<8x512xf32>,
    %c0_24 = arith.constant 0 : index
    %c37 = arith.constant 37 : index
    %20 = vector.load %arg7[%c0_24, %c37] : memref<8x640xf32, #tpu.memory_space<vmem>>, vector<8x512xf32>
    %c56 = arith.constant 56 : index
    %c0_25 = arith.constant 0 : index
    %21 = vector.load %arg8[%c56, %c0_25] : memref<72x512xf32, #tpu.memory_space<vmem>>, vector<8x512xf32>
    tpu.vector_store %arg8[%c56, %c0_25], %20 {strides = array<i32>} : memref<72x512xf32, #tpu.memory_space<vmem>>, vector<8x512xf32>,
    %c0_26 = arith.constant 0 : index
    %c38 = arith.constant 38 : index
    %22 = vector.load %arg7[%c0_26, %c38] : memref<8x640xf32, #tpu.memory_space<vmem>>, vector<8x512xf32>
    %c64 = arith.constant 64 : index
    %c0_27 = arith.constant 0 : index
    %23 = vector.load %arg8[%c64, %c0_27] : memref<72x512xf32, #tpu.memory_space<vmem>>, vector<8x512xf32>
    tpu.vector_store %arg8[%c64, %c0_27], %22 {strides = array<i32>} : memref<72x512xf32, #tpu.memory_space<vmem>>, vector<8x512xf32>,
    %c0_28 = arith.constant 0 : index
    %c0_29 = arith.constant 0 : index
    %24 = vector.load %arg4[%c0_28, %c0_29] : memref<72x72xf32, #tpu.memory_space<vmem>>, vector<72x72xf32>
    %c0_30 = arith.constant 0 : index
    %c0_31 = arith.constant 0 : index
    %25 = vector.load %arg8[%c0_30, %c0_31] : memref<72x512xf32, #tpu.memory_space<vmem>>, vector<72x512xf32>
    %cst = arith.constant dense<0.000000e+00> : vector<72x512xf32>
    %26 = tpu.matmul %24, %25, %cst {dimension_numbers = #tpu.dot_dimension_numbers<[1], [0], [0], [1], [0, 0, 1, 1], [], []>} : vector<72x72xf32>, vector<72x512xf32>, vector<72x512xf32> -> vector<72x512xf32>
    %c0_32 = arith.constant 0 : index
    %c0_33 = arith.constant 0 : index
    %27 = vector.load %arg5[%c0_32, %c0_33] : memref<72x1xf32, #tpu.memory_space<vmem>>, vector<72x1xf32>
    %28 = vector.broadcast %27 : vector<72x1xf32> to vector<72x512xf32>
    %29 = arith.addf %26, %28 : vector<72x512xf32>
    %30 = vector.extract_strided_slice %29 {offsets = [0, 0], sizes = [8, 512], strides = [1, 1]} : vector<72x512xf32> to vector<8x512xf32>
    %31 = vector.extract_strided_slice %29 {offsets = [8, 0], sizes = [32, 512], strides = [1, 1]} : vector<72x512xf32> to vector<32x512xf32>
    %cst_34 = arith.constant -1.000000e+00 : f32
    %cst_35 = arith.constant 1.000000e+00 : f32
    %32 = vector.broadcast %cst_34 : f32 to vector<32x512xf32>
    %33 = arith.maximumf %32, %31 : vector<32x512xf32>
    %34 = vector.broadcast %cst_35 : f32 to vector<32x512xf32>
    %35 = arith.minimumf %34, %33 : vector<32x512xf32>
    %36 = vector.extract_strided_slice %29 {offsets = [40, 0], sizes = [32, 512], strides = [1, 1]} : vector<72x512xf32> to vector<32x512xf32>
    %cst_36 = arith.constant -1.000000e+00 : f32
    %cst_37 = arith.constant 1.000000e+00 : f32
    %37 = vector.broadcast %cst_36 : f32 to vector<32x512xf32>
    %38 = arith.maximumf %37, %36 : vector<32x512xf32>
    %39 = vector.broadcast %cst_37 : f32 to vector<32x512xf32>
    %40 = arith.minimumf %39, %38 : vector<32x512xf32>
    %41 = arith.mulf %35, %40 : vector<32x512xf32>
    %42 = vector.extract_strided_slice %41 {offsets = [0, 0], sizes = [8, 512], strides = [1, 1]} : vector<32x512xf32> to vector<8x512xf32>
    %43 = arith.addf %30, %42 : vector<8x512xf32>
    %44 = vector.extract_strided_slice %41 {offsets = [8, 0], sizes = [8, 512], strides = [1, 1]} : vector<32x512xf32> to vector<8x512xf32>
    %45 = arith.addf %43, %44 : vector<8x512xf32>
    %46 = vector.extract_strided_slice %41 {offsets = [16, 0], sizes = [8, 512], strides = [1, 1]} : vector<32x512xf32> to vector<8x512xf32>
    %47 = arith.addf %45, %46 : vector<8x512xf32>
    %48 = vector.extract_strided_slice %41 {offsets = [24, 0], sizes = [8, 512], strides = [1, 1]} : vector<32x512xf32> to vector<8x512xf32>
    %49 = arith.addf %47, %48 : vector<8x512xf32>
    %c0_38 = arith.constant 0 : index
    %c0_39 = arith.constant 0 : index
    %c0_40 = arith.constant 0 : index
    %50 = vector.load %arg6[%c0_38, %c0_39, %c0_40] : memref<1x8x512xf32, #tpu.memory_space<vmem>>, vector<1x8x512xf32>
    %51 = vector.shape_cast %50 : vector<1x8x512xf32> to vector<8x512xf32>
    %52 = vector.shape_cast %49 : vector<8x512xf32> to vector<1x8x512xf32>
    tpu.vector_store %arg6[%c0_38, %c0_39, %c0_40], %52 {strides = array<i32>} : memref<1x8x512xf32, #tpu.memory_space<vmem>>, vector<1x8x512xf32>,
    return
  }
  func.func @transform_0(%arg0: i32, %arg1: i32) -> (i32, i32, i32) {
    %c0_i32 = arith.constant 0 : i32
    %c0_i32_0 = arith.constant 0 : i32
    return %arg0, %c0_i32, %arg1 : i32, i32, i32
  }
  func.func @transform_1(%arg0: i32, %arg1: i32) -> (i32, i32, i32) {
    %c1_i32 = arith.constant 1 : i32
    %0 = arith.addi %arg1, %c1_i32 : i32
    %c4_i32 = arith.constant 4 : i32
    %1 = arith.muli %0, %c4_i32 : i32
    %c0_i32 = arith.constant 0 : i32
    %c0_i32_0 = arith.constant 0 : i32
    return %arg0, %c0_i32, %1 : i32, i32, i32
  }
  func.func @transform_2(%arg0: i32, %arg1: i32) -> (i32, i32) {
    %c0_i32 = arith.constant 0 : i32
    %c0_i32_0 = arith.constant 0 : i32
    %c0_i32_1 = arith.constant 0 : i32
    return %c0_i32, %c0_i32_0 : i32, i32
  }
  func.func @transform_3(%arg0: i32, %arg1: i32) -> (i32, i32) {
    %c0_i32 = arith.constant 0 : i32
    %c0_i32_0 = arith.constant 0 : i32
    %c0_i32_1 = arith.constant 0 : i32
    return %c0_i32, %c0_i32_0 : i32, i32
  }
  func.func @transform_4(%arg0: i32, %arg1: i32) -> (i32, i32, i32) {
    %c0_i32 = arith.constant 0 : i32
    %c0_i32_0 = arith.constant 0 : i32
    return %arg0, %c0_i32, %arg1 : i32, i32, i32
  }
}

</mosaic_0001>

<llo_original>
// kernel: tpu_custom_call.1
$region0: #{tpu_custom_call.1}
  #allocation0 [shape = 'u32[]', space=smem, size = 0x4, offset = 0x4, fixed_abs, tag = 'smem constant byte address 0x4 - core index']
  #allocation1 [shape = 'u32[144,128]{1,0:T(1,128)}', space=vmem, size = 0x12000, scoped, tag = 'internal scratch']
  #allocation2 [shape = 'f32[8,640]{1,0:T(8,128)}', space=vmem, size = 0x5000, scoped, tag = 'scratch operand']
  #allocation3 [shape = 'f32[72,512]{1,0:T(8,128)}', space=vmem, size = 0x24000, scoped, tag = 'scratch operand']
  %s0 = inlined_call_operand.hbm [shape: f32[2,8,640], index: 0, kind: input, shape index: {}]
  %s1 = inlined_call_operand.hbm [shape: f32[2,8,640], index: 1, kind: input, shape index: {}]
  %s2 = inlined_call_operand.vmem [shape: f32[72,72], index: 2, kind: input, shape index: {}]
  %s3 = inlined_call_operand.vmem [shape: f32[72,1], index: 3, kind: input, shape index: {}]
  %s4 = inlined_call_operand.hbm [shape: f32[2,8,512], index: 4, kind: output, shape index: {}]
  %s5 = sld [smem:[#allocation0]]
  $region57: #{tpu_custom_call.1} parent=0
    _
  %s7 = ssub.s32 1, %s5
  %s8 = scalar_select 0, %s7, %s5
  $region1: #{tpu_custom_call.1} parent=0
    #allocation4 [shape = 'u8[32768]{0}', space=vmem, size = 0x8000, scoped, tag = 'input window, operand 0']
    #allocation5 [shape = 's32[2]{0}', space=sflag, size = 0x8, scoped, tag = 'scoped memory for tpu_custom_call.1']
    #allocation6 [shape = 's32[2]{0}', space=sflag, size = 0x8, scoped, tag = 'scoped memory for tpu_custom_call.1']
    #allocation7 [shape = 'u8[8192]{0}', space=vmem, size = 0x2000, scoped, tag = 'input window, operand 1']
    #allocation8 [shape = 's32[2]{0}', space=sflag, size = 0x8, scoped, tag = 'scoped memory for tpu_custom_call.1']
    #allocation9 [shape = 'u8[32768]{0}', space=vmem, size = 0x8000, scoped, tag = 'output window, operand 0']
    %9 = vsyncpa [#allocation5], 0
    %s10 = scalar_lea.sflag [#allocation5], 1
    %11 = vsyncpa %s10, 0
    %12 = vsyncpa [#allocation8], 0
    %s13 = scalar_lea.sflag [#allocation8], 1
    %14 = vsyncpa %s13, 0
    %15 = vsyncpa [#allocation6], 0
    %s16 = scalar_lea.sflag [#allocation6], 1
    %17 = vsyncpa %s16, 0
    loop: start=0, step=1, limit=4
    $region2: #{tpu_custom_call.1} parent=1 // loop_pre_header
      _
    $region3: #{tpu_custom_call.1} parent=1 // loop_header
      %s19 = sphi 0, %s23
      %p20 = scmp.ge.s32.totalorder %s19, 4
      %s26 = sphi 0, %s38
      %s27 = sphi 0, %s34
      %s28 = sphi 0, %s26
      %s29 = sphi 0, %s27
      %s30 = sphi 0, %s28
      %s31 = sphi 0, %s29
      %s43 = sphi 0, %s45
      %s46 = sphi 0, %s43
      %s47 = sphi 0, %s46
      %s63 = sphi 0, %s47
      %s75 = sphi 0, %s77
      %s78 = sphi 0, %s75
      %s79 = sphi 0, %s78
      %s95 = sphi 0, %s79
      %s99 = sphi 0, %s99
      %s101 = sphi 0, %s99
      %s102 = sphi 0, %s101
      %s116 = sphi 0, %s102
      %s120 = sphi 0, %s120
      %s122 = sphi 0, %s120
      %s123 = sphi 0, %s122
      %s137 = sphi 0, %s123
      %s145 = sphi 0, %s147
      %s148 = sphi 0, %s145
      %s149 = sphi 0, %s148
      %s165 = sphi 0, %s149
    $region4: #{tpu_custom_call.1} parent=1 // loop_header_branch
      %22 = sbr.rel (%p20) target = $region8
    $region5: #{tpu_custom_call.1} parent=1 // loop_body
      %s24 = ssub.s32 %s19, 1
      %s25 = ssub.s32 %s19, 2
      %s32 = sadd.s32 1, %s27
      %p33 = scmp.ge.s32.totalorder %s32, 1
      %s34 = scalar_select %p33, 0, %s32
      %s35 = sadd.s32 1, %s26
      %s36 = scalar_select %p33, %s35, %s26
      %p37 = scmp.ge.s32.totalorder %s36, 2
      %s38 = scalar_select %p37, 0, %s36
      %s39 = ssub.s32 %s26, %s38
      %s40 = ssub.s32 %s27, %s34
      %s41 = sor.u32 %s39, %s40
      %p42 = scmp.eq.s32.totalorder %s41, 0
      %s44 = sadd.s32 %s43, 1
      %s45 = scalar_select %p42, %s43, %s44
      %p48 = pneg %p42
      %p49 = scmp.eq.s32.totalorder %s19, 1
      %p50 = por %p48, %p49
      %p51 = scmp.ne.s32.totalorder %s43, %s46
      %p52 = scmp.eq.s32.totalorder %s19, 0
      %p53 = por %p51, %p52
      %p54 = scmp.ne.s32.totalorder %s43, %s46
      %p55 = scmp.eq.s32.totalorder %s24, 1
      %p56 = por %p54, %p55
      %p57 = scmp.ne.s32.totalorder %s46, %s47
      %p58 = scmp.eq.s32.totalorder %s24, 0
      %p59 = por %p57, %p58
      %p60 = scmp.ne.s32.totalorder %s46, %s47
      %p61 = scmp.eq.s32.totalorder %s25, 1
      %p62 = por %p60, %p61
      %p64 = scmp.ne.s32.totalorder %s47, %s63
      %p65 = scmp.eq.s32.totalorder %s25, 0
      %p66 = por %p64, %p65
      %s67 = sadd.s32 %s27, 1
      %s68 = smul.u32 %s67, 4
      %s69 = sadd.s32 %s34, 1
      %s70 = smul.u32 %s69, 4
      %s71 = ssub.s32 %s26, %s38
      %s72 = ssub.s32 %s68, %s70
      %s73 = sor.u32 %s71, %s72
      %p74 = scmp.eq.s32.totalorder %s73, 0
      %s76 = sadd.s32 %s75, 1
      %s77 = scalar_select %p74, %s75, %s76
      %p80 = pneg %p74
      %p81 = scmp.eq.s32.totalorder %s19, 1
      %p82 = por %p80, %p81
      %p83 = scmp.ne.s32.totalorder %s75, %s78
      %p84 = scmp.eq.s32.totalorder %s19, 0
      %p85 = por %p83, %p84
      %p86 = scmp.ne.s32.totalorder %s75, %s78
      %p87 = scmp.eq.s32.totalorder %s24, 1
      %p88 = por %p86, %p87
      %p89 = scmp.ne.s32.totalorder %s78, %s79
      %p90 = scmp.eq.s32.totalorder %s24, 0
      %p91 = por %p89, %p90
      %p92 = scmp.ne.s32.totalorder %s78, %s79
      %p93 = scmp.eq.s32.totalorder %s25, 1
      %p94 = por %p92, %p93
      %p96 = scmp.ne.s32.totalorder %s79, %s95
      %p97 = scmp.eq.s32.totalorder %s25, 0
      %p98 = por %p96, %p97
      %s100 = sadd.s32 %s99, 1
      %p103 = scmp.eq.s32.totalorder %s19, 1
      %p104 = scmp.ne.s32.totalorder %s99, %s101
      %p105 = scmp.eq.s32.totalorder %s19, 0
      %p106 = por %p104, %p105
      %p107 = scmp.ne.s32.totalorder %s99, %s101
      %p108 = scmp.eq.s32.totalorder %s24, 1
      %p109 = por %p107, %p108
      %p110 = scmp.ne.s32.totalorder %s101, %s102
      %p111 = scmp.eq.s32.totalorder %s24, 0
      %p112 = por %p110, %p111
      %p113 = scmp.ne.s32.totalorder %s101, %s102
      %p114 = scmp.eq.s32.totalorder %s25, 1
      %p115 = por %p113, %p114
      %p117 = scmp.ne.s32.totalorder %s102, %s116
      %p118 = scmp.eq.s32.totalorder %s25, 0
      %p119 = por %p117, %p118
      %s121 = sadd.s32 %s120, 1
      %p124 = scmp.eq.s32.totalorder %s19, 1
      %p125 = scmp.ne.s32.totalorder %s120, %s122
      %p126 = scmp.eq.s32.totalorder %s19, 0
      %p127 = por %p125, %p126
      %p128 = scmp.ne.s32.totalorder %s120, %s122
      %p129 = scmp.eq.s32.totalorder %s24, 1
      %p130 = por %p128, %p129
      %p131 = scmp.ne.s32.totalorder %s122, %s123
      %p132 = scmp.eq.s32.totalorder %s24, 0
      %p133 = por %p131, %p132
      %p134 = scmp.ne.s32.totalorder %s122, %s123
      %p135 = scmp.eq.s32.totalorder %s25, 1
      %p136 = por %p134, %p135
      %p138 = scmp.ne.s32.totalorder %s123, %s137
      %p139 = scmp.eq.s32.totalorder %s25, 0
      %p140 = por %p138, %p139
      %s141 = ssub.s32 %s26, %s38
      %s142 = ssub.s32 %s27, %s34
      %s143 = sor.u32 %s141, %s142
      %p144 = scmp.eq.s32.totalorder %s143, 0
      %s146 = sadd.s32 %s145, 1
      %s147 = scalar_select %p144, %s145, %s146
      %p150 = pneg %p144
      %p151 = scmp.eq.s32.totalorder %s19, 1
      %p152 = por %p150, %p151
      %p153 = scmp.ne.s32.totalorder %s145, %s148
      %p154 = scmp.eq.s32.totalorder %s19, 0
      %p155 = por %p153, %p154
      %p156 = scmp.ne.s32.totalorder %s145, %s148
      %p157 = scmp.eq.s32.totalorder %s24, 1
      %p158 = por %p156, %p157
      %p159 = scmp.ne.s32.totalorder %s148, %s149
      %p160 = scmp.eq.s32.totalorder %s24, 0
      %p161 = por %p159, %p160
      %p162 = scmp.ne.s32.totalorder %s148, %s149
      %p163 = scmp.eq.s32.totalorder %s25, 1
      %p164 = por %p162, %p163
      %p166 = scmp.ne.s32.totalorder %s149, %s165
      %p167 = scmp.eq.s32.totalorder %s25, 0
      %p168 = por %p166, %p167
      %p169 = scmp.le.s32.totalorder 1, %s19
      %p170 = scmp.lt.s32.totalorder %s19, 3
      %p171 = pnand %p169, %p170
      %p172 = pneg %p171
      // Predicated region
      $region9: #{tpu_custom_call.1} parent=5 // pred_check
        _
      $region10: #{tpu_custom_call.1} parent=5 // pred_check_branch
        %174 = sbr.rel (%p171) target = $region12
      $region11: #{tpu_custom_call.1} parent=5 // pred_region
        %s175 = ssub.s32 %s19, 1
        // Predicated region
        $region13: #{tpu_custom_call.1} parent=11 // pred_check
          %p176 = pneg %p112
        $region14: #{tpu_custom_call.1} parent=11 // pred_check_branch
          %178 = sbr.rel (%p176) target = $region16
        $region15: #{tpu_custom_call.1} parent=11 // pred_region
          _
        $region16: #{tpu_custom_call.1} parent=11 // pred_fallthru
          _
        // Predicated region
        $region17: #{tpu_custom_call.1} parent=11 // pred_check
          %p179 = pneg %p133
        $region18: #{tpu_custom_call.1} parent=11 // pred_check_branch
          %181 = sbr.rel (%p179) target = $region20
        $region19: #{tpu_custom_call.1} parent=11 // pred_region
          _
        $region20: #{tpu_custom_call.1} parent=11 // pred_fallthru
          _
      $region12: #{tpu_custom_call.1} parent=5 // pred_fallthru
        _
      %p182 = scmp.lt.s32.totalorder %s19, 2
      // Predicated region
      $region21: #{tpu_custom_call.1} parent=5 // pred_check
        %p183 = pneg %p182
      $region22: #{tpu_custom_call.1} parent=5 // pred_check_branch
        %185 = sbr.rel (%p183) target = $region24
      $region23: #{tpu_custom_call.1} parent=5 // pred_region
        // Predicated region
        $region25: #{tpu_custom_call.1} parent=23 // pred_check
          %p186 = pneg %p53
        $region26: #{tpu_custom_call.1} parent=23 // pred_check_branch
          %188 = sbr.rel (%p186) target = $region28
        $region27: #{tpu_custom_call.1} parent=23 // pred_region
          %s189 = sand.u32 %s43, 1
          %s190 = scalar_lea.sflag [#allocation5], %s189
          %s191 = sand.u32 %s43, 1
          %s192 = smul.addr %s191, 32
          %s193 = scalar_lea.vmem [#allocation4], %s192
          %s194 = smul.u32 4, %s27
          %s195 = ssub.s32 5, %s194
          %p196 = scmp.lt.s32.totalorder %s195, 4
          %s197 = scalar_select %p196, %s195, 4
          %s198 = smul.u32 128, %s197
          %s200 = ssub.s32 512, %s198
          %201 = vsyncadd %s190, %s200
          %p202 = scmp.ne.s32.totalorder 0, %s198
          %s203 = smul.addr %s26, 5
          %s204 = sadd.s32 %s194, %s203
          %s205 = smul.addr %s204, 128
          %s206 = scalar_lea.hbm %s0, %s205
          %s207 = smul.u32 %s197, 8
          %s208 = sshll.u32 %s207, 4
          %s209 = sshll.u32 %s193, 4
          %s210 = int_to_ptr.vmem [resolvable:$true] %s209
          %212 = dma.hbm_to_vmem [thread:$0]  (%p202), %s206, %s208, %s210, %s190
        $region28: #{tpu_custom_call.1} parent=23 // pred_fallthru
          _
        // Predicated region
        $region29: #{tpu_custom_call.1} parent=23 // pred_check
          %p213 = pneg %p85
        $region30: #{tpu_custom_call.1} parent=23 // pred_check_branch
          %215 = sbr.rel (%p213) target = $region32
        $region31: #{tpu_custom_call.1} parent=23 // pred_region
          %s216 = sand.u32 %s75, 1
          %s217 = scalar_lea.sflag [#allocation8], %s216
          %s218 = sand.u32 %s75, 1
          %s219 = smul.addr %s218, 8
          %s220 = scalar_lea.vmem [#allocation7], %s219
          %s221 = sadd.s32 %s27, 1
          %s222 = smul.u32 %s221, 4
          %s224 = ssub.s32 128, 128
          %225 = vsyncadd %s217, %s224
          %s226 = smul.addr %s26, 5
          %s227 = sadd.s32 %s222, %s226
          %s228 = smul.addr %s227, 128
          %s229 = scalar_lea.hbm %s1, %s228
          %s231 = sshll.u32 %s220, 4
          %s232 = int_to_ptr.vmem [resolvable:$true] %s231
          %234 = dma.hbm_to_vmem [thread:$0]  %s229, 128, %s232, %s217
        $region32: #{tpu_custom_call.1} parent=23 // pred_fallthru
          _
      $region24: #{tpu_custom_call.1} parent=5 // pred_fallthru
        _
      %p235 = scmp.le.s32.totalorder 1, %s19
      %p236 = scmp.lt.s32.totalorder %s19, 3
      %p237 = pnand %p235, %p236
      %p238 = pneg %p237
      // Predicated region
      $region33: #{tpu_custom_call.1} parent=5 // pred_check
        _
      $region34: #{tpu_custom_call.1} parent=5 // pred_check_branch
        %240 = sbr.rel (%p237) target = $region36
      $region35: #{tpu_custom_call.1} parent=5 // pred_region
        %s241 = ssub.s32 %s19, 1
        %s242 = sand.u32 %s46, 1
        %s243 = scalar_lea.sflag [#allocation5], %s242
        %s244 = sand.u32 %s46, 1
        %s245 = smul.addr %s244, 32
        %s246 = scalar_lea.vmem [#allocation4], %s245
        // Predicated region
        $region37: #{tpu_custom_call.1} parent=35 // pred_check
          %p247 = pneg %p59
        $region38: #{tpu_custom_call.1} parent=35 // pred_check_branch
          %249 = sbr.rel (%p247) target = $region40
        $region39: #{tpu_custom_call.1} parent=35 // pred_region
          %250 = dma.done %s243, 512
        $region40: #{tpu_custom_call.1} parent=35 // pred_fallthru
          _
        %s251 = sand.u32 %s78, 1
        %s252 = scalar_lea.sflag [#allocation8], %s251
        %s253 = sand.u32 %s78, 1
        %s254 = smul.addr %s253, 8
        %s255 = scalar_lea.vmem [#allocation7], %s254
        // Predicated region
        $region41: #{tpu_custom_call.1} parent=35 // pred_check
          %p256 = pneg %p91
        $region42: #{tpu_custom_call.1} parent=35 // pred_check_branch
          %258 = sbr.rel (%p256) target = $region44
        $region43: #{tpu_custom_call.1} parent=35 // pred_region
          %259 = dma.done %s252, 128
        $region44: #{tpu_custom_call.1} parent=35 // pred_fallthru
          _
        %s260 = sand.u32 %s46, 1
        %s261 = scalar_lea.sflag [#allocation5], %s260
        %s262 = sand.u32 %s46, 1
        %s263 = smul.addr %s262, 32
        %s264 = scalar_lea.vmem [#allocation4], %s263
        %p265 = pneg %p59
        %p266 = pneg %p56
        %s267 = sand.u32 %s78, 1
        %s268 = scalar_lea.sflag [#allocation8], %s267
        %s269 = sand.u32 %s78, 1
        %s270 = smul.addr %s269, 8
        %s271 = scalar_lea.vmem [#allocation7], %s270
        %p272 = pneg %p91
        %p273 = pneg %p88
        %p274 = pneg %p112
        %p275 = pneg %p109
        %p276 = pneg %p133
        %p277 = pneg %p130
        %p278 = pneg %p161
        %p279 = pneg %p158
        %s280 = sand.u32 %s148, 1
        %s281 = scalar_lea.sflag [#allocation6], %s280
        %s282 = sand.u32 %s148, 1
        %s283 = smul.addr %s282, 32
        %s284 = scalar_lea.vmem [#allocation9], %s283
        %s285 = smul.u32 4, %s29
        %s286 = ssub.s32 5, %s285
        %p287 = scmp.lt.s32.totalorder %s286, 4
        %s288 = scalar_select %p287, %s286, 4
        %s289 = smul.u32 128, %s288
        %s290 = sadd.s32 %s29, 1
        %s291 = smul.u32 %s290, 4
        %s292 = smul.u32 4, %s29
        %v293 = vld [vmem:[%s246] sm:$0xff]
        %v294 = vld [vmem:[%s246 + $0x8] sm:$0xff]
        %v295 = vld [vmem:[%s246 + $0x10] sm:$0xff]
        %v296 = vld [vmem:[%s246 + $0x18] sm:$0xff]
        %297 = vst [vmem:[#allocation2] sm:$0xff] %v293
        %298 = vst [vmem:[#allocation2 + $0x8] sm:$0xff] %v294
        %299 = vst [vmem:[#allocation2 + $0x10] sm:$0xff] %v295
        %300 = vst [vmem:[#allocation2 + $0x18] sm:$0xff] %v296
        %v301 = vld [vmem:[%s255] sm:$0xff]
        %302 = vst [vmem:[#allocation2 + $0x20] sm:$0xff] %v301
        %v303 = vld [vmem:[#allocation2] sm:$0xff]
        %v304 = vld [vmem:[#allocation2 + $0x8] sm:$0xff]
        %v305 = vld [vmem:[#allocation2 + $0x10] sm:$0xff]
        %v306 = vld [vmem:[#allocation2 + $0x18] sm:$0xff]
        %307 = vst [vmem:[#allocation3] sm:$0xff] %v303
        %308 = vst [vmem:[#allocation3 + $0x8] sm:$0xff] %v304
        %309 = vst [vmem:[#allocation3 + $0x10] sm:$0xff] %v305
        %310 = vst [vmem:[#allocation3 + $0x18] sm:$0xff] %v306
        %v311 = vld [vmem:[#allocation2] sm:$0xff]
        %v312 = vld [vmem:[#allocation2 + $0x8] sm:$0xff]
        %v313 = vld [vmem:[#allocation2 + $0x10] sm:$0xff]
        %v314 = vld [vmem:[#allocation2 + $0x18] sm:$0xff]
        %v315 = vld [vmem:[#allocation2 + $0x20] sm:$0xff]
        %321 = vrot.lane.b32.xlu0 %v311, 127
        %v322 = vpop.permute.xlu0 %321
        %323 = vrot.lane.b32.xlu0 %v312, 127
        %v324 = vpop.permute.xlu0 %323
        %325 = vrot.lane.b32.xlu0 %v313, 127
        %v326 = vpop.permute.xlu0 %325
        %327 = vrot.lane.b32.xlu0 %v314, 127
        %v328 = vpop.permute.xlu0 %327
        %329 = vrot.lane.b32.xlu0 %v315, 127
        %v330 = vpop.permute.xlu0 %329
        %vm331 = vcmask 1039360
        %v332 = vsel %vm331, %v322, %v324
        %v333 = vsel %vm331, %v324, %v326
        %v334 = vsel %vm331, %v326, %v328
        %v335 = vsel %vm331, %v328, %v330
        %340 = vst [vmem:[#allocation3 + $0x20] sm:$0xff] %v332
        %341 = vst [vmem:[#allocation3 + $0x28] sm:$0xff] %v333
        %342 = vst [vmem:[#allocation3 + $0x30] sm:$0xff] %v334
        %343 = vst [vmem:[#allocation3 + $0x38] sm:$0xff] %v335
        %v344 = vld [vmem:[#allocation2] sm:$0xff]
        %v345 = vld [vmem:[#allocation2 + $0x8] sm:$0xff]
        %v346 = vld [vmem:[#allocation2 + $0x10] sm:$0xff]
        %v347 = vld [vmem:[#allocation2 + $0x18] sm:$0xff]
        %v348 = vld [vmem:[#allocation2 + $0x20] sm:$0xff]
        %354 = vrot.lane.b32.xlu0 %v344, 126
        %v355 = vpop.permute.xlu0 %354
        %356 = vrot.lane.b32.xlu0 %v345, 126
        %v357 = vpop.permute.xlu0 %356
        %358 = vrot.lane.b32.xlu0 %v346, 126
        %v359 = vpop.permute.xlu0 %358
        %360 = vrot.lane.b32.xlu0 %v347, 126
        %v361 = vpop.permute.xlu0 %360
        %362 = vrot.lane.b32.xlu0 %v348, 126
        %v363 = vpop.permute.xlu0 %362
        %vm364 = vcmask 1031168
        %v365 = vsel %vm364, %v355, %v357
        %v366 = vsel %vm364, %v357, %v359
        %v367 = vsel %vm364, %v359, %v361
        %v368 = vsel %vm364, %v361, %v363
        %373 = vst [vmem:[#allocation3 + $0x40] sm:$0xff] %v365
        %374 = vst [vmem:[#allocation3 + $0x48] sm:$0xff] %v366
        %375 = vst [vmem:[#allocation3 + $0x50] sm:$0xff] %v367
        %376 = vst [vmem:[#allocation3 + $0x58] sm:$0xff] %v368
        %v377 = vld [vmem:[#allocation2] sm:$0xff]
        %v378 = vld [vmem:[#allocation2 + $0x8] sm:$0xff]
        %v379 = vld [vmem:[#allocation2 + $0x10] sm:$0xff]
        %v380 = vld [vmem:[#allocation2 + $0x18] sm:$0xff]
        %v381 = vld [vmem:[#allocation2 + $0x20] sm:$0xff]
        %387 = vrot.lane.b32.xlu0 %v377, 110
        %v388 = vpop.permute.xlu0 %387
        %389 = vrot.lane.b32.xlu0 %v378, 110
        %v390 = vpop.permute.xlu0 %389
        %391 = vrot.lane.b32.xlu0 %v379, 110
        %v392 = vpop.permute.xlu0 %391
        %393 = vrot.lane.b32.xlu0 %v380, 110
        %v394 = vpop.permute.xlu0 %393
        %395 = vrot.lane.b32.xlu0 %v381, 110
        %v396 = vpop.permute.xlu0 %395
        %vm397 = vcmask 900096
        %v398 = vsel %vm397, %v388, %v390
        %v399 = vsel %vm397, %v390, %v392
        %v400 = vsel %vm397, %v392, %v394
        %v401 = vsel %vm397, %v394, %v396
        %406 = vst [vmem:[#allocation3 + $0x60] sm:$0xff] %v398
        %407 = vst [vmem:[#allocation3 + $0x68] sm:$0xff] %v399
        %408 = vst [vmem:[#allocation3 + $0x70] sm:$0xff] %v400
        %409 = vst [vmem:[#allocation3 + $0x78] sm:$0xff] %v401
        %v410 = vld [vmem:[#allocation2] sm:$0xff]
        %v411 = vld [vmem:[#allocation2 + $0x8] sm:$0xff]
        %v412 = vld [vmem:[#allocation2 + $0x10] sm:$0xff]
        %v413 = vld [vmem:[#allocation2 + $0x18] sm:$0xff]
        %v414 = vld [vmem:[#allocation2 + $0x20] sm:$0xff]
        %420 = vrot.lane.b32.xlu0 %v410, 109
        %v421 = vpop.permute.xlu0 %420
        %422 = vrot.lane.b32.xlu0 %v411, 109
        %v423 = vpop.permute.xlu0 %422
        %424 = vrot.lane.b32.xlu0 %v412, 109
        %v425 = vpop.permute.xlu0 %424
        %426 = vrot.lane.b32.xlu0 %v413, 109
        %v427 = vpop.permute.xlu0 %426
        %428 = vrot.lane.b32.xlu0 %v414, 109
        %v429 = vpop.permute.xlu0 %428
        %vm430 = vcmask 891904
        %v431 = vsel %vm430, %v421, %v423
        %v432 = vsel %vm430, %v423, %v425
        %v433 = vsel %vm430, %v425, %v427
        %v434 = vsel %vm430, %v427, %v429
        %439 = vst [vmem:[#allocation3 + $0x80] sm:$0xff] %v431
        %440 = vst [vmem:[#allocation3 + $0x88] sm:$0xff] %v432
        %441 = vst [vmem:[#allocation3 + $0x90] sm:$0xff] %v433
        %442 = vst [vmem:[#allocation3 + $0x98] sm:$0xff] %v434
        %v443 = vld [vmem:[#allocation2] sm:$0xff]
        %v444 = vld [vmem:[#allocation2 + $0x8] sm:$0xff]
        %v445 = vld [vmem:[#allocation2 + $0x10] sm:$0xff]
        %v446 = vld [vmem:[#allocation2 + $0x18] sm:$0xff]
        %v447 = vld [vmem:[#allocation2 + $0x20] sm:$0xff]
        %453 = vrot.lane.b32.xlu0 %v443, 108
        %v454 = vpop.permute.xlu0 %453
        %455 = vrot.lane.b32.xlu0 %v444, 108
        %v456 = vpop.permute.xlu0 %455
        %457 = vrot.lane.b32.xlu0 %v445, 108
        %v458 = vpop.permute.xlu0 %457
        %459 = vrot.lane.b32.xlu0 %v446, 108
        %v460 = vpop.permute.xlu0 %459
        %461 = vrot.lane.b32.xlu0 %v447, 108
        %v462 = vpop.permute.xlu0 %461
        %vm463 = vcmask 883712
        %v464 = vsel %vm463, %v454, %v456
        %v465 = vsel %vm463, %v456, %v458
        %v466 = vsel %vm463, %v458, %v460
        %v467 = vsel %vm463, %v460, %v462
        %472 = vst [vmem:[#allocation3 + $0xa0] sm:$0xff] %v464
        %473 = vst [vmem:[#allocation3 + $0xa8] sm:$0xff] %v465
        %474 = vst [vmem:[#allocation3 + $0xb0] sm:$0xff] %v466
        %475 = vst [vmem:[#allocation3 + $0xb8] sm:$0xff] %v467
        %v476 = vld [vmem:[#allocation2] sm:$0xff]
        %v477 = vld [vmem:[#allocation2 + $0x8] sm:$0xff]
        %v478 = vld [vmem:[#allocation2 + $0x10] sm:$0xff]
        %v479 = vld [vmem:[#allocation2 + $0x18] sm:$0xff]
        %v480 = vld [vmem:[#allocation2 + $0x20] sm:$0xff]
        %486 = vrot.lane.b32.xlu0 %v476, 92
        %v487 = vpop.permute.xlu0 %486
        %488 = vrot.lane.b32.xlu0 %v477, 92
        %v489 = vpop.permute.xlu0 %488
        %490 = vrot.lane.b32.xlu0 %v478, 92
        %v491 = vpop.permute.xlu0 %490
        %492 = vrot.lane.b32.xlu0 %v479, 92
        %v493 = vpop.permute.xlu0 %492
        %494 = vrot.lane.b32.xlu0 %v480, 92
        %v495 = vpop.permute.xlu0 %494
        %vm496 = vcmask 752640
        %v497 = vsel %vm496, %v487, %v489
        %v498 = vsel %vm496, %v489, %v491
        %v499 = vsel %vm496, %v491, %v493
        %v500 = vsel %vm496, %v493, %v495
        %505 = vst [vmem:[#allocation3 + $0xc0] sm:$0xff] %v497
        %506 = vst [vmem:[#allocation3 + $0xc8] sm:$0xff] %v498
        %507 = vst [vmem:[#allocation3 + $0xd0] sm:$0xff] %v499
        %508 = vst [vmem:[#allocation3 + $0xd8] sm:$0xff] %v500
        %v509 = vld [vmem:[#allocation2] sm:$0xff]
        %v510 = vld [vmem:[#allocation2 + $0x8] sm:$0xff]
        %v511 = vld [vmem:[#allocation2 + $0x10] sm:$0xff]
        %v512 = vld [vmem:[#allocation2 + $0x18] sm:$0xff]
        %v513 = vld [vmem:[#allocation2 + $0x20] sm:$0xff]
        %519 = vrot.lane.b32.xlu0 %v509, 91
        %v520 = vpop.permute.xlu0 %519
        %521 = vrot.lane.b32.xlu0 %v510, 91
        %v522 = vpop.permute.xlu0 %521
        %523 = vrot.lane.b32.xlu0 %v511, 91
        %v524 = vpop.permute.xlu0 %523
        %525 = vrot.lane.b32.xlu0 %v512, 91
        %v526 = vpop.permute.xlu0 %525
        %527 = vrot.lane.b32.xlu0 %v513, 91
        %v528 = vpop.permute.xlu0 %527
        %vm529 = vcmask 744448
        %v530 = vsel %vm529, %v520, %v522
        %v531 = vsel %vm529, %v522, %v524
        %v532 = vsel %vm529, %v524, %v526
        %v533 = vsel %vm529, %v526, %v528
        %538 = vst [vmem:[#allocation3 + $0xe0] sm:$0xff] %v530
        %539 = vst [vmem:[#allocation3 + $0xe8] sm:$0xff] %v531
        %540 = vst [vmem:[#allocation3 + $0xf0] sm:$0xff] %v532
        %541 = vst [vmem:[#allocation3 + $0xf8] sm:$0xff] %v533
        %v542 = vld [vmem:[#allocation2] sm:$0xff]
        %v543 = vld [vmem:[#allocation2 + $0x8] sm:$0xff]
        %v544 = vld [vmem:[#allocation2 + $0x10] sm:$0xff]
        %v545 = vld [vmem:[#allocation2 + $0x18] sm:$0xff]
        %v546 = vld [vmem:[#allocation2 + $0x20] sm:$0xff]
        %552 = vrot.lane.b32.xlu0 %v542, 90
        %v553 = vpop.permute.xlu0 %552
        %554 = vrot.lane.b32.xlu0 %v543, 90
        %v555 = vpop.permute.xlu0 %554
        %556 = vrot.lane.b32.xlu0 %v544, 90
        %v557 = vpop.permute.xlu0 %556
        %558 = vrot.lane.b32.xlu0 %v545, 90
        %v559 = vpop.permute.xlu0 %558
        %560 = vrot.lane.b32.xlu0 %v546, 90
        %v561 = vpop.permute.xlu0 %560
        %vm562 = vcmask 736256
        %v563 = vsel %vm562, %v553, %v555
        %v564 = vsel %vm562, %v555, %v557
        %v565 = vsel %vm562, %v557, %v559
        %v566 = vsel %vm562, %v559, %v561
        %571 = vst [vmem:[#allocation3 + $0x100] sm:$0xff] %v563
        %572 = vst [vmem:[#allocation3 + $0x108] sm:$0xff] %v564
        %573 = vst [vmem:[#allocation3 + $0x110] sm:$0xff] %v565
        %574 = vst [vmem:[#allocation3 + $0x118] sm:$0xff] %v566
        %v575 = vld [vmem:[%s2] sm:$0xff]
        %v576 = vld [vmem:[%s2 + $0x8] sm:$0xff]
        %v577 = vld [vmem:[%s2 + $0x10] sm:$0xff]
        %v578 = vld [vmem:[%s2 + $0x18] sm:$0xff]
        %v579 = vld [vmem:[%s2 + $0x20] sm:$0xff]
        %v580 = vld [vmem:[%s2 + $0x28] sm:$0xff]
        %v581 = vld [vmem:[%s2 + $0x30] sm:$0xff]
        %v582 = vld [vmem:[%s2 + $0x38] sm:$0xff]
        %v583 = vld [vmem:[%s2 + $0x40] sm:$0xff]
        %v584 = vld [vmem:[#allocation3] sm:$0xff]
        %v585 = vld [vmem:[#allocation3 + $0x8] sm:$0xff]
        %v586 = vld [vmem:[#allocation3 + $0x10] sm:$0xff]
        %v587 = vld [vmem:[#allocation3 + $0x18] sm:$0xff]
        %v588 = vld [vmem:[#allocation3 + $0x20] sm:$0xff]
        %v589 = vld [vmem:[#allocation3 + $0x28] sm:$0xff]
        %v590 = vld [vmem:[#allocation3 + $0x30] sm:$0xff]
        %v591 = vld [vmem:[#allocation3 + $0x38] sm:$0xff]
        %v592 = vld [vmem:[#allocation3 + $0x40] sm:$0xff]
        %v593 = vld [vmem:[#allocation3 + $0x48] sm:$0xff]
        %v594 = vld [vmem:[#allocation3 + $0x50] sm:$0xff]
        %v595 = vld [vmem:[#allocation3 + $0x58] sm:$0xff]
        %v596 = vld [vmem:[#allocation3 + $0x60] sm:$0xff]
        %v597 = vld [vmem:[#allocation3 + $0x68] sm:$0xff]
        %v598 = vld [vmem:[#allocation3 + $0x70] sm:$0xff]
        %v599 = vld [vmem:[#allocation3 + $0x78] sm:$0xff]
        %v600 = vld [vmem:[#allocation3 + $0x80] sm:$0xff]
        %v601 = vld [vmem:[#allocation3 + $0x88] sm:$0xff]
        %v602 = vld [vmem:[#allocation3 + $0x90] sm:$0xff]
        %v603 = vld [vmem:[#allocation3 + $0x98] sm:$0xff]
        %v604 = vld [vmem:[#allocation3 + $0xa0] sm:$0xff]
        %v605 = vld [vmem:[#allocation3 + $0xa8] sm:$0xff]
        %v606 = vld [vmem:[#allocation3 + $0xb0] sm:$0xff]
        %v607 = vld [vmem:[#allocation3 + $0xb8] sm:$0xff]
        %v608 = vld [vmem:[#allocation3 + $0xc0] sm:$0xff]
        %v609 = vld [vmem:[#allocation3 + $0xc8] sm:$0xff]
        %v610 = vld [vmem:[#allocation3 + $0xd0] sm:$0xff]
        %v611 = vld [vmem:[#allocation3 + $0xd8] sm:$0xff]
        %v612 = vld [vmem:[#allocation3 + $0xe0] sm:$0xff]
        %v613 = vld [vmem:[#allocation3 + $0xe8] sm:$0xff]
        %v614 = vld [vmem:[#allocation3 + $0xf0] sm:$0xff]
        %v615 = vld [vmem:[#allocation3 + $0xf8] sm:$0xff]
        %v616 = vld [vmem:[#allocation3 + $0x100] sm:$0xff]
        %v617 = vld [vmem:[#allocation3 + $0x108] sm:$0xff]
        %v618 = vld [vmem:[#allocation3 + $0x110] sm:$0xff]
        %v619 = vld [vmem:[#allocation3 + $0x118] sm:$0xff]
        %v620 = vld [vmem:[%s3] sm:$0xff]
        %v621 = vld [vmem:[%s3 + $0x8] sm:$0xff]
        %v622 = vld [vmem:[%s3 + $0x10] sm:$0xff]
        %v623 = vld [vmem:[%s3 + $0x18] sm:$0xff]
        %v624 = vld [vmem:[%s3 + $0x20] sm:$0xff]
        %v625 = vld [vmem:[%s3 + $0x28] sm:$0xff]
        %v626 = vld [vmem:[%s3 + $0x30] sm:$0xff]
        %v627 = vld [vmem:[%s3 + $0x38] sm:$0xff]
        %v628 = vld [vmem:[%s3 + $0x40] sm:$0xff]
        %630 = vset.pattern.permute.xlu0 0
        %631 = vperm.xlu0 %630, %v620
        %v632 = vpop.permute.xlu0 %631
        %635 = vset.pattern.permute.xlu0 0
        %636 = vperm.xlu0 %635, %v621
        %v637 = vpop.permute.xlu0 %636
        %640 = vset.pattern.permute.xlu0 0
        %641 = vperm.xlu0 %640, %v622
        %v642 = vpop.permute.xlu0 %641
        %645 = vset.pattern.permute.xlu0 0
        %646 = vperm.xlu0 %645, %v623
        %v647 = vpop.permute.xlu0 %646
        %650 = vset.pattern.permute.xlu0 0
        %651 = vperm.xlu0 %650, %v624
        %v652 = vpop.permute.xlu0 %651
        %655 = vset.pattern.permute.xlu0 0
        %656 = vperm.xlu0 %655, %v625
        %v657 = vpop.permute.xlu0 %656
        %660 = vset.pattern.permute.xlu0 0
        %661 = vperm.xlu0 %660, %v626
        %v662 = vpop.permute.xlu0 %661
        %665 = vset.pattern.permute.xlu0 0
        %666 = vperm.xlu0 %665, %v627
        %v667 = vpop.permute.xlu0 %666
        %670 = vset.pattern.permute.xlu0 0
        %671 = vperm.xlu0 %670, %v628
        %v672 = vpop.permute.xlu0 %671
        %vm674 = vcmask 588800
        %v676 = vsel %vm674, %v575, 0
        %v679 = vsel %vm674, %v576, 0
        %v682 = vsel %vm674, %v577, 0
        %v685 = vsel %vm674, %v578, 0
        %v688 = vsel %vm674, %v579, 0
        %v691 = vsel %vm674, %v580, 0
        %v694 = vsel %vm674, %v581, 0
        %v697 = vsel %vm674, %v582, 0
        %v700 = vsel %vm674, %v583, 0
        %702 = vmatprep.subr.mxu0 %v585
        %703 = vmatpush1.msra.mxu0 %v584
        %704 = vmatprep.subr.mxu0 %v589
        %705 = vmatpush1.msra.mxu0 %v588
        %706 = vmatprep.subr.mxu0 %v593
        %707 = vmatpush1.msra.mxu0 %v592
        %708 = vmatprep.subr.mxu0 %v597
        %709 = vmatpush1.msra.mxu0 %v596
        %710 = vmatprep.subr.mxu0 %v601
        %711 = vmatpush1.msra.mxu0 %v600
        %712 = vmatprep.subr.mxu0 %v605
        %713 = vmatpush1.msra.mxu0 %v604
        %714 = vmatprep.subr.mxu0 %v609
        %715 = vmatpush1.msra.mxu0 %v608
        %716 = vmatprep.subr.mxu0 %v613
        %717 = vmatpush1.msra.mxu0 %v612
        %718 = vmatprep.subr.mxu0 %v617
        %719 = vmatpush1.msra.mxu0 %v616
        %720 = vmatprep.subr.mxu0 0.0
        %721 = vmatpush1.msra.mxu0 0.0
        %722 = vmatprep.subr.mxu0 0.0
        %723 = vmatpush1.msra.mxu0 0.0
        %724 = vmatprep.subr.mxu0 0.0
        %725 = vmatpush1.msra.mxu0 0.0
        %726 = vmatprep.subr.mxu0 0.0
        %727 = vmatpush1.msra.mxu0 0.0
        %728 = vmatprep.subr.mxu0 0.0
        %729 = vmatpush1.msra.mxu0 0.0
        %730 = vmatprep.subr.mxu0 0.0
        %731 = vmatpush1.msra.mxu0 0.0
        %732 = vmatprep.subr.mxu0 0.0
        %733 = vmatpush1.msra.mxu0 0.0
        %734 = vmatprep.subr.mxu0 0.0
        %735 = vmatpush1.msra.mxu0 0.0
        %736 = vmatprep.subr.mxu0 0.0
        %737 = vmatpush1.msra.mxu0 0.0
        %738 = vmatprep.subr.mxu0 0.0
        %739 = vmatpush1.msra.mxu0 0.0
        %740 = vmatprep.subr.mxu0 0.0
        %741 = vmatpush1.msra.mxu0 0.0
        %742 = vmatprep.subr.mxu0 0.0
        %743 = vmatpush1.msra.mxu0 0.0
        %744 = vmatprep.subr.mxu0 0.0
        %745 = vmatpush1.msra.mxu0 0.0
        %746 = vmatprep.subr.mxu0 0.0
        %747 = vmatpush1.msra.mxu0 0.0
        %748 = vmatprep.subr.mxu0 0.0
        %749 = vmatpush1.msra.mxu0 0.0
        %750 = vmatprep.subr.mxu0 0.0
        %751 = vmatpush1.msra.mxu0 0.0
        %752 = vmatprep.subr.mxu0 0.0
        %753 = vmatpush1.msra.mxu0 0.0
        %754 = vmatprep.subr.mxu0 0.0
        %755 = vmatpush1.msra.mxu0 0.0
        %756 = vmatprep.subr.mxu0 0.0
        %757 = vmatpush1.msra.mxu0 0.0
        %758 = vmatprep.subr.mxu0 0.0
        %759 = vmatpush1.msra.mxu0 0.0
        %760 = vmatprep.subr.mxu0 0.0
        %761 = vmatpush1.msra.mxu0 0.0
        %762 = vmatprep.subr.mxu0 0.0
        %763 = vmatpush1.msra.mxu0 0.0
        %764 = vmatprep.subr.mxu0 0.0
        %765 = vmatpush1.msra.mxu0 0.0
        %766 = vmatprep.mubr.f32.mxu0 0.0
        %767 = vmatmul.mubr.f32.gmra.mrb[0].mxu0 %v676
        %v768 = vpop.f32.mrb[0].mxu0
        %v769 = vadd.f32 %v632, %v768
        %v770 = vpop.f32.mrb[0].mxu0
        %v771 = vadd.f32 %v632, %v770
        %772 = vmatprep.mubr.f32.mxu0 0.0
        %773 = vmatmul.mubr.f32.gmra.mrb[0].mxu0 %v679
        %v774 = vpop.f32.mrb[0].mxu0
        %v775 = vadd.f32 %v637, %v774
        %v776 = vpop.f32.mrb[0].mxu0
        %v777 = vadd.f32 %v637, %v776
        %778 = vmatprep.mubr.f32.mxu0 0.0
        %779 = vmatmul.mubr.f32.gmra.mrb[0].mxu0 %v682
        %v780 = vpop.f32.mrb[0].mxu0
        %v781 = vadd.f32 %v642, %v780
        %v782 = vpop.f32.mrb[0].mxu0
        %v783 = vadd.f32 %v642, %v782
        %784 = vmatprep.mubr.f32.mxu0 0.0
        %785 = vmatmul.mubr.f32.gmra.mrb[0].mxu0 %v685
        %v786 = vpop.f32.mrb[0].mxu0
        %v787 = vadd.f32 %v647, %v786
        %v788 = vpop.f32.mrb[0].mxu0
        %v789 = vadd.f32 %v647, %v788
        %790 = vmatprep.mubr.f32.mxu0 0.0
        %791 = vmatmul.mubr.f32.gmra.mrb[0].mxu0 %v688
        %v792 = vpop.f32.mrb[0].mxu0
        %v793 = vadd.f32 %v652, %v792
        %v794 = vpop.f32.mrb[0].mxu0
        %v795 = vadd.f32 %v652, %v794
        %796 = vmatprep.mubr.f32.mxu0 0.0
        %797 = vmatmul.mubr.f32.gmra.mrb[0].mxu0 %v691
        %v798 = vpop.f32.mrb[0].mxu0
        %v799 = vadd.f32 %v657, %v798
        %v800 = vpop.f32.mrb[0].mxu0
        %v801 = vadd.f32 %v657, %v800
        %802 = vmatprep.mubr.f32.mxu0 0.0
        %803 = vmatmul.mubr.f32.gmra.mrb[0].mxu0 %v694
        %v804 = vpop.f32.mrb[0].mxu0
        %v805 = vadd.f32 %v662, %v804
        %v806 = vpop.f32.mrb[0].mxu0
        %v807 = vadd.f32 %v662, %v806
        %808 = vmatprep.mubr.f32.mxu0 0.0
        %809 = vmatmul.mubr.f32.gmra.mrb[0].mxu0 %v697
        %v810 = vpop.f32.mrb[0].mxu0
        %v811 = vadd.f32 %v667, %v810
        %v812 = vpop.f32.mrb[0].mxu0
        %v813 = vadd.f32 %v667, %v812
        %814 = vmatprep.mubr.f32.mxu0 0.0
        %815 = vmatmul.mubr.f32.gmra.mrb[0].mxu0 %v700
        %v816 = vpop.f32.mrb[0].mxu0
        %v817 = vadd.f32 %v672, %v816
        %v818 = vpop.f32.mrb[0].mxu0
        %v819 = vadd.f32 %v672, %v818
        %820 = vdwg.mxu0
        %821 = vmatprep.subr.mxu0 %v587
        %822 = vmatpush1.msra.mxu0 %v586
        %823 = vmatprep.subr.mxu0 %v591
        %824 = vmatpush1.msra.mxu0 %v590
        %825 = vmatprep.subr.mxu0 %v595
        %826 = vmatpush1.msra.mxu0 %v594
        %827 = vmatprep.subr.mxu0 %v599
        %828 = vmatpush1.msra.mxu0 %v598
        %829 = vmatprep.subr.mxu0 %v603
        %830 = vmatpush1.msra.mxu0 %v602
        %831 = vmatprep.subr.mxu0 %v607
        %832 = vmatpush1.msra.mxu0 %v606
        %833 = vmatprep.subr.mxu0 %v611
        %834 = vmatpush1.msra.mxu0 %v610
        %835 = vmatprep.subr.mxu0 %v615
        %836 = vmatpush1.msra.mxu0 %v614
        %837 = vmatprep.subr.mxu0 %v619
        %838 = vmatpush1.msra.mxu0 %v618
        %839 = vmatprep.subr.mxu0 0.0
        %840 = vmatpush1.msra.mxu0 0.0
        %841 = vmatprep.subr.mxu0 0.0
        %842 = vmatpush1.msra.mxu0 0.0
        %843 = vmatprep.subr.mxu0 0.0
        %844 = vmatpush1.msra.mxu0 0.0
        %845 = vmatprep.subr.mxu0 0.0
        %846 = vmatpush1.msra.mxu0 0.0
        %847 = vmatprep.subr.mxu0 0.0
        %848 = vmatpush1.msra.mxu0 0.0
        %849 = vmatprep.subr.mxu0 0.0
        %850 = vmatpush1.msra.mxu0 0.0
        %851 = vmatprep.subr.mxu0 0.0
        %852 = vmatpush1.msra.mxu0 0.0
        %853 = vmatprep.subr.mxu0 0.0
        %854 = vmatpush1.msra.mxu0 0.0
        %855 = vmatprep.subr.mxu0 0.0
        %856 = vmatpush1.msra.mxu0 0.0
        %857 = vmatprep.subr.mxu0 0.0
        %858 = vmatpush1.msra.mxu0 0.0
        %859 = vmatprep.subr.mxu0 0.0
        %860 = vmatpush1.msra.mxu0 0.0
        %861 = vmatprep.subr.mxu0 0.0
        %862 = vmatpush1.msra.mxu0 0.0
        %863 = vmatprep.subr.mxu0 0.0
        %864 = vmatpush1.msra.mxu0 0.0
        %865 = vmatprep.subr.mxu0 0.0
        %866 = vmatpush1.msra.mxu0 0.0
        %867 = vmatprep.subr.mxu0 0.0
        %868 = vmatpush1.msra.mxu0 0.0
        %869 = vmatprep.subr.mxu0 0.0
        %870 = vmatpush1.msra.mxu0 0.0
        %871 = vmatprep.subr.mxu0 0.0
        %872 = vmatpush1.msra.mxu0 0.0
        %873 = vmatprep.subr.mxu0 0.0
        %874 = vmatpush1.msra.mxu0 0.0
        %875 = vmatprep.subr.mxu0 0.0
        %876 = vmatpush1.msra.mxu0 0.0
        %877 = vmatprep.subr.mxu0 0.0
        %878 = vmatpush1.msra.mxu0 0.0
        %879 = vmatprep.subr.mxu0 0.0
        %880 = vmatpush1.msra.mxu0 0.0
        %881 = vmatprep.subr.mxu0 0.0
        %882 = vmatpush1.msra.mxu0 0.0
        %883 = vmatprep.subr.mxu0 0.0
        %884 = vmatpush1.msra.mxu0 0.0
        %885 = vmatprep.mubr.f32.mxu0 0.0
        %886 = vmatmul.mubr.f32.gmra.mrb[0].mxu0 %v676
        %v887 = vpop.f32.mrb[0].mxu0
        %v888 = vadd.f32 %v632, %v887
        %v889 = vpop.f32.mrb[0].mxu0
        %v890 = vadd.f32 %v632, %v889
        %891 = vmatprep.mubr.f32.mxu0 0.0
        %892 = vmatmul.mubr.f32.gmra.mrb[0].mxu0 %v679
        %v893 = vpop.f32.mrb[0].mxu0
        %v894 = vadd.f32 %v637, %v893
        %v895 = vpop.f32.mrb[0].mxu0
        %v896 = vadd.f32 %v637, %v895
        %897 = vmatprep.mubr.f32.mxu0 0.0
        %898 = vmatmul.mubr.f32.gmra.mrb[0].mxu0 %v682
        %v899 = vpop.f32.mrb[0].mxu0
        %v900 = vadd.f32 %v642, %v899
        %v901 = vpop.f32.mrb[0].mxu0
        %v902 = vadd.f32 %v642, %v901
        %903 = vmatprep.mubr.f32.mxu0 0.0
        %904 = vmatmul.mubr.f32.gmra.mrb[0].mxu0 %v685
        %v905 = vpop.f32.mrb[0].mxu0
        %v906 = vadd.f32 %v647, %v905
        %v907 = vpop.f32.mrb[0].mxu0
        %v908 = vadd.f32 %v647, %v907
        %909 = vmatprep.mubr.f32.mxu0 0.0
        %910 = vmatmul.mubr.f32.gmra.mrb[0].mxu0 %v688
        %v911 = vpop.f32.mrb[0].mxu0
        %v912 = vadd.f32 %v652, %v911
        %v913 = vpop.f32.mrb[0].mxu0
        %v914 = vadd.f32 %v652, %v913
        %915 = vmatprep.mubr.f32.mxu0 0.0
        %916 = vmatmul.mubr.f32.gmra.mrb[0].mxu0 %v691
        %v917 = vpop.f32.mrb[0].mxu0
        %v918 = vadd.f32 %v657, %v917
        %v919 = vpop.f32.mrb[0].mxu0
        %v920 = vadd.f32 %v657, %v919
        %921 = vmatprep.mubr.f32.mxu0 0.0
        %922 = vmatmul.mubr.f32.gmra.mrb[0].mxu0 %v694
        %v923 = vpop.f32.mrb[0].mxu0
        %v924 = vadd.f32 %v662, %v923
        %v925 = vpop.f32.mrb[0].mxu0
        %v926 = vadd.f32 %v662, %v925
        %927 = vmatprep.mubr.f32.mxu0 0.0
        %928 = vmatmul.mubr.f32.gmra.mrb[0].mxu0 %v697
        %v929 = vpop.f32.mrb[0].mxu0
        %v930 = vadd.f32 %v667, %v929
        %v931 = vpop.f32.mrb[0].mxu0
        %v932 = vadd.f32 %v667, %v931
        %933 = vmatprep.mubr.f32.mxu0 0.0
        %934 = vmatmul.mubr.f32.gmra.mrb[0].mxu0 %v700
        %v935 = vpop.f32.mrb[0].mxu0
        %v936 = vadd.f32 %v672, %v935
        %v937 = vpop.f32.mrb[0].mxu0
        %v938 = vadd.f32 %v672, %v937
        %939 = vdwg.mxu0
        %v940 = vmax.f32 %v775, -1.0
        %v941 = vmax.f32 %v777, -1.0
        %v942 = vmax.f32 %v894, -1.0
        %v943 = vmax.f32 %v896, -1.0
        %v944 = vmax.f32 %v781, -1.0
        %v945 = vmax.f32 %v783, -1.0
        %v946 = vmax.f32 %v900, -1.0
        %v947 = vmax.f32 %v902, -1.0
        %v948 = vmax.f32 %v787, -1.0
        %v949 = vmax.f32 %v789, -1.0
        %v950 = vmax.f32 %v906, -1.0
        %v951 = vmax.f32 %v908, -1.0
        %v952 = vmax.f32 %v793, -1.0
        %v953 = vmax.f32 %v795, -1.0
        %v954 = vmax.f32 %v912, -1.0
        %v955 = vmax.f32 %v914, -1.0
        %v956 = vmin.f32 %v940, 1.0
        %v957 = vmin.f32 %v941, 1.0
        %v958 = vmin.f32 %v942, 1.0
        %v959 = vmin.f32 %v943, 1.0
        %v960 = vmin.f32 %v944, 1.0
        %v961 = vmin.f32 %v945, 1.0
        %v962 = vmin.f32 %v946, 1.0
        %v963 = vmin.f32 %v947, 1.0
        %v964 = vmin.f32 %v948, 1.0
        %v965 = vmin.f32 %v949, 1.0
        %v966 = vmin.f32 %v950, 1.0
        %v967 = vmin.f32 %v951, 1.0
        %v968 = vmin.f32 %v952, 1.0
        %v969 = vmin.f32 %v953, 1.0
        %v970 = vmin.f32 %v954, 1.0
        %v971 = vmin.f32 %v955, 1.0
        %v972 = vmax.f32 %v799, -1.0
        %v973 = vmax.f32 %v801, -1.0
        %v974 = vmax.f32 %v918, -1.0
        %v975 = vmax.f32 %v920, -1.0
        %v976 = vmax.f32 %v805, -1.0
        %v977 = vmax.f32 %v807, -1.0
        %v978 = vmax.f32 %v924, -1.0
        %v979 = vmax.f32 %v926, -1.0
        %v980 = vmax.f32 %v811, -1.0
        %v981 = vmax.f32 %v813, -1.0
        %v982 = vmax.f32 %v930, -1.0
        %v983 = vmax.f32 %v932, -1.0
        %v984 = vmax.f32 %v817, -1.0
        %v985 = vmax.f32 %v819, -1.0
        %v986 = vmax.f32 %v936, -1.0
        %v987 = vmax.f32 %v938, -1.0
        %v988 = vmin.f32 %v972, 1.0
        %v989 = vmin.f32 %v973, 1.0
        %v990 = vmin.f32 %v974, 1.0
        %v991 = vmin.f32 %v975, 1.0
        %v992 = vmin.f32 %v976, 1.0
        %v993 = vmin.f32 %v977, 1.0
        %v994 = vmin.f32 %v978, 1.0
        %v995 = vmin.f32 %v979, 1.0
        %v996 = vmin.f32 %v980, 1.0
        %v997 = vmin.f32 %v981, 1.0
        %v998 = vmin.f32 %v982, 1.0
        %v999 = vmin.f32 %v983, 1.0
        %v1000 = vmin.f32 %v984, 1.0
        %v1001 = vmin.f32 %v985, 1.0
        %v1002 = vmin.f32 %v986, 1.0
        %v1003 = vmin.f32 %v987, 1.0
        %v1004 = vmul.f32 %v956, %v988
        %v1005 = vmul.f32 %v957, %v989
        %v1006 = vmul.f32 %v958, %v990
        %v1007 = vmul.f32 %v959, %v991
        %v1008 = vmul.f32 %v960, %v992
        %v1009 = vmul.f32 %v961, %v993
        %v1010 = vmul.f32 %v962, %v994
        %v1011 = vmul.f32 %v963, %v995
        %v1012 = vmul.f32 %v964, %v996
        %v1013 = vmul.f32 %v965, %v997
        %v1014 = vmul.f32 %v966, %v998
        %v1015 = vmul.f32 %v967, %v999
        %v1016 = vmul.f32 %v968, %v1000
        %v1017 = vmul.f32 %v969, %v1001
        %v1018 = vmul.f32 %v970, %v1002
        %v1019 = vmul.f32 %v971, %v1003
        %v1020 = vadd.f32 %v769, %v1004
        %v1021 = vadd.f32 %v771, %v1005
        %v1022 = vadd.f32 %v888, %v1006
        %v1023 = vadd.f32 %v890, %v1007
        %v1024 = vadd.f32 %v1020, %v1008
        %v1025 = vadd.f32 %v1021, %v1009
        %v1026 = vadd.f32 %v1022, %v1010
        %v1027 = vadd.f32 %v1023, %v1011
        %v1028 = vadd.f32 %v1024, %v1012
        %v1029 = vadd.f32 %v1025, %v1013
        %v1030 = vadd.f32 %v1026, %v1014
        %v1031 = vadd.f32 %v1027, %v1015
        %v1032 = vadd.f32 %v1028, %v1016
        %v1033 = vadd.f32 %v1029, %v1017
        %v1034 = vadd.f32 %v1030, %v1018
        %v1035 = vadd.f32 %v1031, %v1019
        %1036 = vst [vmem:[%s284] sm:$0xff] %v1032
        %1037 = vst [vmem:[%s284 + $0x8] sm:$0xff] %v1033
        %1038 = vst [vmem:[%s284 + $0x10] sm:$0xff] %v1034
        %1039 = vst [vmem:[%s284 + $0x18] sm:$0xff] %v1035
        %s1040 = sand.u32 %s148, 1
        %s1041 = scalar_lea.sflag [#allocation6], %s1040
        %s1042 = sand.u32 %s148, 1
        %s1043 = smul.addr %s1042, 32
        %s1044 = scalar_lea.vmem [#allocation9], %s1043
        // Predicated region
        $region45: #{tpu_custom_call.1} parent=35 // pred_check
          %p1045 = pneg %p158
        $region46: #{tpu_custom_call.1} parent=35 // pred_check_branch
          %1047 = sbr.rel (%p1045) target = $region48
        $region47: #{tpu_custom_call.1} parent=35 // pred_region
          %s1048 = smul.u32 4, %s29
          %s1050 = ssub.s32 512, 512
          %1051 = vsyncadd %s1041, %s1050
          %s1052 = smul.addr %s28, 4
          %s1053 = sadd.s32 %s1048, %s1052
          %s1054 = smul.addr %s1053, 128
          %s1055 = scalar_lea.hbm %s4, %s1054
          %s1057 = sshll.u32 %s1044, 4
          %s1058 = int_to_ptr.vmem [resolvable:$true] %s1057
          %1060 = dma.vmem_to_hbm [thread:$0]  %s1058, 512, %s1055, %s1041
        $region48: #{tpu_custom_call.1} parent=35 // pred_fallthru
          _
      $region36: #{tpu_custom_call.1} parent=5 // pred_fallthru
        _
      %p1061 = scmp.le.s32.totalorder 2, %s19
      // Predicated region
      $region49: #{tpu_custom_call.1} parent=5 // pred_check
        %p1062 = pneg %p1061
      $region50: #{tpu_custom_call.1} parent=5 // pred_check_branch
        %1064 = sbr.rel (%p1062) target = $region52
      $region51: #{tpu_custom_call.1} parent=5 // pred_region
        %s1065 = ssub.s32 %s19, 2
        // Predicated region
        $region53: #{tpu_custom_call.1} parent=51 // pred_check
          %p1066 = pneg %p164
        $region54: #{tpu_custom_call.1} parent=51 // pred_check_branch
          %1068 = sbr.rel (%p1066) target = $region56
        $region55: #{tpu_custom_call.1} parent=51 // pred_region
          %s1069 = sand.u32 %s149, 1
          %s1070 = scalar_lea.sflag [#allocation6], %s1069
          %s1071 = sand.u32 %s149, 1
          %s1072 = smul.addr %s1071, 32
          %s1073 = scalar_lea.vmem [#allocation9], %s1072
          %1074 = dma.done %s1070, 512
        $region56: #{tpu_custom_call.1} parent=51 // pred_fallthru
          _
      $region52: #{tpu_custom_call.1} parent=5 // pred_fallthru
        _
    $region6: #{tpu_custom_call.1} parent=1 // loop_footer
      %s23 = sadd.s32 1, %s19
    $region7: #{tpu_custom_call.1} parent=1 // loop_footer_branch
      %18 = sbr.rel target = $region3
    $region8: #{tpu_custom_call.1} parent=1 // loop_exit
      _
    %1075 = vsyncpa [#allocation5], 1
    %s1076 = scalar_lea.sflag [#allocation5], 1
    %1077 = vsyncpa %s1076, 1
    %1078 = vsyncpa [#allocation8], 1
    %s1079 = scalar_lea.sflag [#allocation8], 1
    %1080 = vsyncpa %s1079, 1
    %1081 = vsyncpa [#allocation6], 1
    %s1082 = scalar_lea.sflag [#allocation6], 1
    %1083 = vsyncpa %s1082, 1

</llo_original>
